<compile_context>
chip_gen: v6e
topology: v6e:2x2x1
jax: 0.10.0
libtpu: 0.0.40
codegen_flags: <defaults>
</compile_context>

<pallas_src>
import functools

import jax
import jax.numpy as jnp
from jax.experimental import pallas as pl
from jax.experimental.pallas import tpu as pltpu


def _smooth_kernel(w_ref, o_col_ref, o_row_ref, out_ref, acc_ref, *,
                   n_pix, tm, tn, need_row_mask, need_col_mask):
    i = pl.program_id(0)
    j = pl.program_id(1)

    @pl.when(j == 0)
    def _():
        acc_ref[...] = jnp.zeros_like(acc_ref)

    # w_ij * (o_j - o_i)^2 over this (tm, tn) tile — pure VPU work.
    w = w_ref[...].astype(jnp.float32)
    # NOTE: the (tm,1)->(tm,tn) lane splat of o_col is inherent to the
    # broadcast formulation (review estimates it at a few % of VALU).
    diff = o_row_ref[...] - o_col_ref[...]          # (1,tn) - (tm,1) -> (tm,tn)
    prod = w * diff * diff

    def _accumulate(p):
        # (tm, tn) -> (8, tn): sublane-group reduction (tree of vreg adds);
        # no per-step cross-lane reduce and no full-tile acc read-modify-write.
        acc_ref[...] += p.reshape(tm // 8, 8, tn).sum(axis=0)

    edge_preds = []
    if need_row_mask:
        edge_preds.append(i == pl.num_programs(0) - 1)
    if need_col_mask:
        edge_preds.append(j == pl.num_programs(1) - 1)

    if edge_preds:  # static: mask code only emitted when N is not tile-divisible
        is_edge = functools.reduce(jnp.logical_or, edge_preds)

        @pl.when(is_edge)
        def _():
            valid = None
            if need_row_mask:
                rows = i * tm + jax.lax.broadcasted_iota(jnp.int32, (tm, tn), 0)
                valid = rows < n_pix
            if need_col_mask:
                cols = j * tn + jax.lax.broadcasted_iota(jnp.int32, (tm, tn), 1)
                cvalid = cols < n_pix
                valid = cvalid if valid is None else valid & cvalid
            # Mask prod (not just w): OOB HBM garbage may be NaN/Inf.
            _accumulate(jnp.where(valid, prod, 0.0))

        @pl.when(jnp.logical_not(is_edge))
        def _():
            _accumulate(prod)
    else:
        _accumulate(prod)

    @pl.when(j == pl.num_programs(1) - 1)
    def _():
        # One XLU collapse per row block (amortized over all column steps),
        # written to a lane-dense (1, 8, 128) output block.
        s = jnp.sum(acc_ref[...], keepdims=True)             # (1, 1)
        out_ref[...] = jnp.broadcast_to(s, out_ref.shape)    # (1, 8, 128)


def bilateral_solver_loss(w_ij, output, target, lam, *, tm=None, tn=None):
    """Computes  N*lam*mean(w_ij*(o^T - o)^2) + mean((o - t)^2)  (scalar)."""
    n = w_ij.shape[0]
    assert w_ij.shape == (n, n)
    assert n >= 8, "N must be >= 8"  # TODO(synk): tiny-N fallback path

    o = output.reshape(n).astype(jnp.float32)
    t = target.reshape(n).astype(jnp.float32)
    o_col = o.reshape(n, 1)
    o_row = o.reshape(1, n)

    w_item = jnp.dtype(w_ij.dtype).itemsize

    # ---- tile selection ----------------------------------------------------
    # Defaults: bf16 -> (1024, 2048) (2 x 4 MiB double buffer), f32 -> (1024, 1024).
    if tm is None:
        tm = 1024
    if tn is None:
        tn = 2048 if w_item <= 2 else 1024

    # Sublane granularity: 16 keeps bf16 packing clean; 8 is the hard minimum.
    sub = 16 if (w_item < 4 and n >= 16) else 8
    tm = max(sub, (min(tm, n) // sub) * sub)
    tn = min(tn, n)
    if tn < n:
        tn = max(128, (tn // 128) * 128)

    # Megacore: if everything fits a single row block, split rows so both
    # TensorCores (v7x) get a "parallel" block to work on.
    if pl.cdiv(n, tm) == 1 and n >= 2 * sub:
        half = (n + 1) // 2
        tm = ((half + sub - 1) // sub) * sub

    grid_m = pl.cdiv(n, tm)
    grid_n = pl.cdiv(n, tn)
    need_row_mask = (n % tm) != 0
    need_col_mask = (n % tn) != 0

    kernel = functools.partial(
        _smooth_kernel, n_pix=n, tm=tm, tn=tn,
        need_row_mask=need_row_mask, need_col_mask=need_col_mask)

    # ---- VMEM budget ---------------------------------------------------------
    vmem_need = (2 * tm * tn * w_item        # double-buffered w tile
                 + 2 * (tm + tn) * 4         # o_col / o_row double buffers
                 + 8 * tn * 4                # (8, tn) accumulator scratch
                 + 2 * 8 * 128 * 4           # output block double buffer
                 + (1 << 20))                # headroom for internal scratch
    vmem_limit = None
    if vmem_need > (12 << 20):
        try:
            cap = int(pltpu.get_tpu_info().vmem_capacity_bytes)
        except Exception:
            cap = 64 << 20                   # conservative: v7x-sized part
        vmem_limit = min(vmem_need + (4 << 20), (cap * 5) // 8)

    partial_blocks = pl.pallas_call(
        kernel,
        out_shape=jax.ShapeDtypeStruct((grid_m, 8, 128), jnp.float32),
        grid_spec=pltpu.PrefetchScalarGridSpec(
            num_scalar_prefetch=0,
            grid=(grid_m, grid_n),
            in_specs=[
                # TODO(synk): add pipeline_mode=pl.Buffered(3) on the w tile if
                # v7x profiling shows exposed DMA at step boundaries.
                pl.BlockSpec((tm, tn), lambda i, j: (i, j)),   # w_ij tile
                pl.BlockSpec((tm, 1), lambda i, j: (i, 0)),    # output column
                pl.BlockSpec((1, tn), lambda i, j: (0, j)),    # output row
            ],
            out_specs=pl.BlockSpec((1, 8, 128), lambda i, j: (i, 0, 0)),
            scratch_shapes=[pltpu.VMEM((8, tn), jnp.float32)],
        ),
        compiler_params=pltpu.CompilerParams(
            dimension_semantics=("parallel", "arbitrary"),
            vmem_limit_bytes=vmem_limit),
    )(w_ij, o_col, o_row)

    # Tiny O(grid_m) combine + O(N) data-fidelity term in plain JAX.
    smooth_sum = jnp.sum(partial_blocks[:, 0, 0])
    n_f = jnp.float32(n)
    smooth_term = n_f * jnp.float32(lam) * smooth_sum / (n_f * n_f)
    data_term = jnp.mean((o - t) ** 2)
    return smooth_term + data_term


def build_w_ij(reference, sigma_space, sigma_luma, dtype=jnp.bfloat16):
    """Parameter setup (glue, plain JAX) — mirrors BilateralSolver.__init__.

    Computed in f32 and stored in `dtype` (bf16 by default: the kernel is a
    pure HBM stream of this matrix, so halving bytes is ~2x on v5e/v6e).
    """
    # TODO(synk): O(N^2) dense construction; fine for the demo size only.
    h, w = reference.shape            # reference is (H, W); image_size = (W, H)
    pos_x = jnp.tile(jnp.linspace(0.0, w - 1, w)[None, :], (h, 1))
    pos_y = jnp.tile(jnp.linspace(0.0, h - 1, h)[:, None], (1, w))
    pos_xy = jnp.stack([pos_x, pos_y], axis=-1).reshape(-1, 2)
    p_ij = -jnp.sum((pos_xy[:, None, :] - pos_xy[None, :, :]) ** 2,
                    axis=-1).astype(jnp.float32) / (2.0 * sigma_space ** 2)
    guide = reference.astype(jnp.float32).reshape(-1)
    g_ij = -((guide[:, None] - guide[None, :]) ** 2) / (2.0 * sigma_luma ** 2)
    return jnp.exp(p_ij + g_ij).astype(dtype)


if __name__ == "__main__":
    key = jax.random.PRNGKey(0)
    k_ref, k_tgt = jax.random.split(key)

    H, W = 16, 16                     # small spatial size -> N = 256
    sigma_space, sigma_luma, lam = 32.0, 8.0, 128.0

    # Deterministic synthetic "image" inputs in [0, 255].
    reference = jax.random.uniform(k_ref, (H, W), jnp.float32) * 255.0
    target_img = jax.random.uniform(k_tgt, (H, W), jnp.float32) * 255.0

    w_f32 = build_w_ij(reference, sigma_space, sigma_luma, dtype=jnp.float32)
    w_bf16 = w_f32.astype(jnp.bfloat16)      # recommended storage dtype

    target = (target_img / 255.0).reshape(-1, 1)
    output = (target_img / 255.0).reshape(-1, 1)   # nn.Parameter init == target/255

    def ref_loss(w):
        # Plain-JAX reference of the PyTorch forward (same w values as kernel).
        wf = w.astype(jnp.float32)
        return (W * H * lam * jnp.mean(wf * (output.T - output) ** 2)
                + jnp.mean((output - target) ** 2))

    # 1) bf16 w, default tiles: clamps to (128, 256), grid (2, 1) -> exercises
    #    the megacore row split; no remainder masking.
    loss = bilateral_solver_loss(w_bf16, output, target, lam)
    jax.block_until_ready(loss)
    assert jnp.allclose(loss, ref_loss(w_bf16), rtol=1e-5, atol=1e-6), (
        loss, ref_loss(w_bf16))

    # 2) f32 w, default tiles.
    loss_f32 = bilateral_solver_loss(w_f32, output, target, lam)
    jax.block_until_ready(loss_f32)
    assert jnp.allclose(loss_f32, ref_loss(w_f32), rtol=1e-5, atol=1e-6), (
        loss_f32, ref_loss(w_f32))

    # 3) f32 w, explicit small tiles: grid (3, 2) with a masked remainder row
    #    block -> exercises the boundary-gated mask path.
    loss_tiled = bilateral_solver_loss(w_f32, output, target, lam, tm=96, tn=128)
    jax.block_until_ready(loss_tiled)
    assert jnp.allclose(loss_tiled, ref_loss(w_f32), rtol=1e-5, atol=1e-6), (
        loss_tiled, ref_loss(w_f32))

    print("KERNEL_OK")
</pallas_src>

<mosaic_0001>
module attributes {stable_mosaic.version = 11 : i64} {
  func.func @_smooth_kernel(%arg0: i32, %arg1: i32, %arg2: memref<128x256xbf16, #tpu.memory_space<vmem>>, %arg3: memref<128x1xf32, #tpu.memory_space<vmem>>, %arg4: memref<1x256xf32, #tpu.memory_space<vmem>>, %arg5: memref<1x8x128xf32, #tpu.memory_space<vmem>>, %arg6: memref<8x256xf32, #tpu.memory_space<vmem>>) attributes {dimension_semantics = [#tpu.dimension_semantics<parallel>, #tpu.dimension_semantics<arbitrary>], iteration_bounds = array<i64: 2, 1>, scalar_prefetch = 0 : i64, scratch_operands = 1 : i64, tpu.core_type = #tpu.core_type<tc>, window_params = [{transform_indices = @transform_0, window_bounds = array<i64: 128, 256>}, {transform_indices = @transform_1, window_bounds = array<i64: 128, 1>}, {transform_indices = @transform_2, window_bounds = array<i64: 1, 256>}, {transform_indices = @transform_3, window_bounds = array<i64: 1, 8, 128>}]} {
    %c0_i32 = arith.constant 0 : i32
    %0 = arith.cmpi eq, %arg1, %c0_i32 : i32
    %1 = arith.extui %0 : i1 to i32
    %c0_i32_0 = arith.constant 0 : i32
    %2 = arith.cmpi ne, %1, %c0_i32_0 : i32
    scf.if %2 {
      %cst_12 = arith.constant 0.000000e+00 : f32
      %20 = vector.broadcast %cst_12 : f32 to vector<8x256xf32>
      %c0_13 = arith.constant 0 : index
      %c0_14 = arith.constant 0 : index
      %21 = vector.load %arg6[%c0_13, %c0_14] : memref<8x256xf32, #tpu.memory_space<vmem>>, vector<8x256xf32>
      tpu.vector_store %arg6[%c0_13, %c0_14], %20 {strides = array<i32>} : memref<8x256xf32, #tpu.memory_space<vmem>>, vector<8x256xf32>,
    } else {
    }
    %c0 = arith.constant 0 : index
    %c0_1 = arith.constant 0 : index
    %3 = vector.load %arg2[%c0, %c0_1] : memref<128x256xbf16, #tpu.memory_space<vmem>>, vector<128x256xbf16>
    %4 = arith.extf %3 : vector<128x256xbf16> to vector<128x256xf32>
    %c0_2 = arith.constant 0 : index
    %c0_3 = arith.constant 0 : index
    %5 = vector.load %arg4[%c0_2, %c0_3] : memref<1x256xf32, #tpu.memory_space<vmem>>, vector<1x256xf32>
    %c0_4 = arith.constant 0 : index
    %c0_5 = arith.constant 0 : index
    %6 = vector.load %arg3[%c0_4, %c0_5] : memref<128x1xf32, #tpu.memory_space<vmem>>, vector<128x1xf32>
    %7 = vector.broadcast %5 : vector<1x256xf32> to vector<128x256xf32>
    %8 = vector.broadcast %6 : vector<128x1xf32> to vector<128x256xf32>
    %9 = arith.subf %7, %8 : vector<128x256xf32>
    %10 = arith.mulf %4, %9 : vector<128x256xf32>
    %11 = arith.mulf %10, %9 : vector<128x256xf32>
    %c0_6 = arith.constant 0 : index
    %c0_7 = arith.constant 0 : index
    %12 = vector.load %arg6[%c0_6, %c0_7] : memref<8x256xf32, #tpu.memory_space<vmem>>, vector<8x256xf32>
    %13 = vector.shape_cast %11 : vector<128x256xf32> to vector<16x8x256xf32>
    %cst = arith.constant dense<0.000000e+00> : vector<8x256xf32>
    %14 = vector.multi_reduction <add>, %13, %cst [0] : vector<16x8x256xf32> to vector<8x256xf32>
    %15 = arith.addf %12, %14 : vector<8x256xf32>
    %c0_8 = arith.constant 0 : index
    %c0_9 = arith.constant 0 : index
    %16 = vector.load %arg6[%c0_8, %c0_9] : memref<8x256xf32, #tpu.memory_space<vmem>>, vector<8x256xf32>
    tpu.vector_store %arg6[%c0_8, %c0_9], %15 {strides = array<i32>} : memref<8x256xf32, #tpu.memory_space<vmem>>, vector<8x256xf32>,
    %c0_i32_10 = arith.constant 0 : i32
    %17 = arith.cmpi eq, %arg1, %c0_i32_10 : i32
    %18 = arith.extui %17 : i1 to i32
    %c0_i32_11 = arith.constant 0 : i32
    %19 = arith.cmpi ne, %18, %c0_i32_11 : i32
    scf.if %19 {
      %c0_12 = arith.constant 0 : index
      %c0_13 = arith.constant 0 : index
      %20 = vector.load %arg6[%c0_12, %c0_13] : memref<8x256xf32, #tpu.memory_space<vmem>>, vector<8x256xf32>
      %21 = vector.shape_cast %20 : vector<8x256xf32> to vector<1x8x256xf32>
      %cst_14 = arith.constant dense<0.000000e+00> : vector<1xf32>
      %22 = vector.multi_reduction <add>, %21, %cst_14 [1, 2] : vector<1x8x256xf32> to vector<1xf32>
      %23 = vector.shape_cast %22 : vector<1xf32> to vector<1x1x1xf32>
      %24 = vector.extract %23[0, 0, 0] : f32 from vector<1x1x1xf32>
      %25 = vector.broadcast %24 : f32 to vector<1x1xf32>
      %26 = vector.shape_cast %25 : vector<1x1xf32> to vector<1x1x1xf32>
      %27 = vector.broadcast %26 : vector<1x1x1xf32> to vector<1x8x128xf32>
      %c0_15 = arith.constant 0 : index
      %c0_16 = arith.constant 0 : index
      %c0_17 = arith.constant 0 : index
      %28 = vector.load %arg5[%c0_15, %c0_16, %c0_17] : memref<1x8x128xf32, #tpu.memory_space<vmem>>, vector<1x8x128xf32>
      tpu.vector_store %arg5[%c0_15, %c0_16, %c0_17], %27 {strides = array<i32>} : memref<1x8x128xf32, #tpu.memory_space<vmem>>, vector<1x8x128xf32>,
    } else {
    }
    return
  }
  func.func @transform_0(%arg0: i32, %arg1: i32) -> (i32, i32) {
    %c0_i32 = arith.constant 0 : i32
    return %arg0, %arg1 : i32, i32
  }
  func.func @transform_1(%arg0: i32, %arg1: i32) -> (i32, i32) {
    %c0_i32 = arith.constant 0 : i32
    %c0_i32_0 = arith.constant 0 : i32
    return %arg0, %c0_i32 : i32, i32
  }
  func.func @transform_2(%arg0: i32, %arg1: i32) -> (i32, i32) {
    %c0_i32 = arith.constant 0 : i32
    %c0_i32_0 = arith.constant 0 : i32
    return %c0_i32, %arg1 : i32, i32
  }
  func.func @transform_3(%arg0: i32, %arg1: i32) -> (i32, i32, i32) {
    %c0_i32 = arith.constant 0 : i32
    %c0_i32_0 = arith.constant 0 : i32
    %c0_i32_1 = arith.constant 0 : i32
    return %arg0, %c0_i32, %c0_i32_0 : i32, i32, i32
  }
}

</mosaic_0001>

<llo_original>
// kernel: tpu_custom_call.1
$region0: #{tpu_custom_call.1}
  #allocation0 [shape = 'u32[]', space=smem, size = 0x4, offset = 0x4, fixed_abs, tag = 'smem constant byte address 0x4 - core index']
  #allocation1 [shape = 'u32[144,128]{1,0:T(1,128)}', space=vmem, size = 0x12000, scoped, tag = 'internal scratch']
  #allocation2 [shape = 'f32[8,256]{1,0:T(8,128)}', space=vmem, size = 0x2000, scoped, tag = 'scratch operand']
  %s0 = inlined_call_operand.vmem [shape: bf16[256,256], index: 0, kind: input, shape index: {}]
  %s1 = inlined_call_operand.vmem [shape: f32[256,1], index: 1, kind: input, shape index: {}]
  %s2 = inlined_call_operand.vmem [shape: f32[1,256], index: 2, kind: input, shape index: {}]
  %s3 = inlined_call_operand.hbm [shape: f32[2,8,128], index: 3, kind: output, shape index: {}]
  %s4 = sld [smem:[#allocation0]]
  $region53: #{tpu_custom_call.1} parent=0
    _
  %s6 = ssub.s32 1, %s4
  %s7 = scalar_select 0, %s6, %s4
  $region1: #{tpu_custom_call.1} parent=0
    #allocation3 [shape = 'u8[8192]{0}', space=vmem, size = 0x2000, scoped, tag = 'output window, operand 0']
    #allocation4 [shape = 's32[2]{0}', space=sflag, size = 0x8, scoped, tag = 'scoped memory for tpu_custom_call.1']
    %8 = vsyncpa [#allocation4], 0
    %s9 = scalar_lea.sflag [#allocation4], 1
    %10 = vsyncpa %s9, 0
    loop: start=0, step=1, limit=4
    $region2: #{tpu_custom_call.1} parent=1 // loop_pre_header
      _
    $region3: #{tpu_custom_call.1} parent=1 // loop_header
      %s12 = sphi 0, %s16
      %p13 = scmp.ge.s32.totalorder %s12, 4
      %s19 = sphi 0, %s31
      %s20 = sphi 0, %s27
      %s21 = sphi 0, %s19
      %s22 = sphi 0, %s20
      %s23 = sphi 0, %s21
      %s24 = sphi 0, %s22
      %s36 = sphi 0, %s38
      %s39 = sphi 0, %s36
      %s40 = sphi 0, %s39
      %s56 = sphi 0, %s40
      %s62 = sphi 0, %s64
      %s65 = sphi 0, %s62
      %s66 = sphi 0, %s65
      %s82 = sphi 0, %s66
      %s88 = sphi 0, %s90
      %s91 = sphi 0, %s88
      %s92 = sphi 0, %s91
      %s108 = sphi 0, %s92
      %s114 = sphi 0, %s116
      %s117 = sphi 0, %s114
      %s118 = sphi 0, %s117
      %s134 = sphi 0, %s118
    $region4: #{tpu_custom_call.1} parent=1 // loop_header_branch
      %15 = sbr.rel (%p13) target = $region8
    $region5: #{tpu_custom_call.1} parent=1 // loop_body
      %s17 = ssub.s32 %s12, 1
      %s18 = ssub.s32 %s12, 2
      %s25 = sadd.s32 1, %s20
      %p26 = scmp.ge.s32.totalorder %s25, 1
      %s27 = scalar_select %p26, 0, %s25
      %s28 = sadd.s32 1, %s19
      %s29 = scalar_select %p26, %s28, %s19
      %p30 = scmp.ge.s32.totalorder %s29, 2
      %s31 = scalar_select %p30, 0, %s29
      %s32 = ssub.s32 %s19, %s31
      %s33 = ssub.s32 %s20, %s27
      %s34 = sor.u32 %s32, %s33
      %p35 = scmp.eq.s32.totalorder %s34, 0
      %s37 = sadd.s32 %s36, 1
      %s38 = scalar_select %p35, %s36, %s37
      %p41 = pneg %p35
      %p42 = scmp.eq.s32.totalorder %s12, 1
      %p43 = por %p41, %p42
      %p44 = scmp.ne.s32.totalorder %s36, %s39
      %p45 = scmp.eq.s32.totalorder %s12, 0
      %p46 = por %p44, %p45
      %p47 = scmp.ne.s32.totalorder %s36, %s39
      %p48 = scmp.eq.s32.totalorder %s17, 1
      %p49 = por %p47, %p48
      %p50 = scmp.ne.s32.totalorder %s39, %s40
      %p51 = scmp.eq.s32.totalorder %s17, 0
      %p52 = por %p50, %p51
      %p53 = scmp.ne.s32.totalorder %s39, %s40
      %p54 = scmp.eq.s32.totalorder %s18, 1
      %p55 = por %p53, %p54
      %p57 = scmp.ne.s32.totalorder %s40, %s56
      %p58 = scmp.eq.s32.totalorder %s18, 0
      %p59 = por %p57, %p58
      %s60 = ssub.s32 %s19, %s31
      %p61 = scmp.eq.s32.totalorder %s60, 0
      %s63 = sadd.s32 %s62, 1
      %s64 = scalar_select %p61, %s62, %s63
      %p67 = pneg %p61
      %p68 = scmp.eq.s32.totalorder %s12, 1
      %p69 = por %p67, %p68
      %p70 = scmp.ne.s32.totalorder %s62, %s65
      %p71 = scmp.eq.s32.totalorder %s12, 0
      %p72 = por %p70, %p71
      %p73 = scmp.ne.s32.totalorder %s62, %s65
      %p74 = scmp.eq.s32.totalorder %s17, 1
      %p75 = por %p73, %p74
      %p76 = scmp.ne.s32.totalorder %s65, %s66
      %p77 = scmp.eq.s32.totalorder %s17, 0
      %p78 = por %p76, %p77
      %p79 = scmp.ne.s32.totalorder %s65, %s66
      %p80 = scmp.eq.s32.totalorder %s18, 1
      %p81 = por %p79, %p80
      %p83 = scmp.ne.s32.totalorder %s66, %s82
      %p84 = scmp.eq.s32.totalorder %s18, 0
      %p85 = por %p83, %p84
      %s86 = ssub.s32 %s20, %s27
      %p87 = scmp.eq.s32.totalorder %s86, 0
      %s89 = sadd.s32 %s88, 1
      %s90 = scalar_select %p87, %s88, %s89
      %p93 = pneg %p87
      %p94 = scmp.eq.s32.totalorder %s12, 1
      %p95 = por %p93, %p94
      %p96 = scmp.ne.s32.totalorder %s88, %s91
      %p97 = scmp.eq.s32.totalorder %s12, 0
      %p98 = por %p96, %p97
      %p99 = scmp.ne.s32.totalorder %s88, %s91
      %p100 = scmp.eq.s32.totalorder %s17, 1
      %p101 = por %p99, %p100
      %p102 = scmp.ne.s32.totalorder %s91, %s92
      %p103 = scmp.eq.s32.totalorder %s17, 0
      %p104 = por %p102, %p103
      %p105 = scmp.ne.s32.totalorder %s91, %s92
      %p106 = scmp.eq.s32.totalorder %s18, 1
      %p107 = por %p105, %p106
      %p109 = scmp.ne.s32.totalorder %s92, %s108
      %p110 = scmp.eq.s32.totalorder %s18, 0
      %p111 = por %p109, %p110
      %s112 = ssub.s32 %s19, %s31
      %p113 = scmp.eq.s32.totalorder %s112, 0
      %s115 = sadd.s32 %s114, 1
      %s116 = scalar_select %p113, %s114, %s115
      %p119 = pneg %p113
      %p120 = scmp.eq.s32.totalorder %s12, 1
      %p121 = por %p119, %p120
      %p122 = scmp.ne.s32.totalorder %s114, %s117
      %p123 = scmp.eq.s32.totalorder %s12, 0
      %p124 = por %p122, %p123
      %p125 = scmp.ne.s32.totalorder %s114, %s117
      %p126 = scmp.eq.s32.totalorder %s17, 1
      %p127 = por %p125, %p126
      %p128 = scmp.ne.s32.totalorder %s117, %s118
      %p129 = scmp.eq.s32.totalorder %s17, 0
      %p130 = por %p128, %p129
      %p131 = scmp.ne.s32.totalorder %s117, %s118
      %p132 = scmp.eq.s32.totalorder %s18, 1
      %p133 = por %p131, %p132
      %p135 = scmp.ne.s32.totalorder %s118, %s134
      %p136 = scmp.eq.s32.totalorder %s18, 0
      %p137 = por %p135, %p136
      %p138 = scmp.le.s32.totalorder 1, %s12
      %p139 = scmp.lt.s32.totalorder %s12, 3
      %p140 = pnand %p138, %p139
      %p141 = pneg %p140
      // Predicated region
      $region9: #{tpu_custom_call.1} parent=5 // pred_check
        _
      $region10: #{tpu_custom_call.1} parent=5 // pred_check_branch
        %143 = sbr.rel (%p140) target = $region12
      $region11: #{tpu_custom_call.1} parent=5 // pred_region
        %s144 = ssub.s32 %s12, 1
        // Predicated region
        $region13: #{tpu_custom_call.1} parent=11 // pred_check
          %p145 = pneg %p104
        $region14: #{tpu_custom_call.1} parent=11 // pred_check_branch
          %147 = sbr.rel (%p145) target = $region16
        $region15: #{tpu_custom_call.1} parent=11 // pred_region
          %s148 = smul.u32 2, %s22
          %p149 = scmp.lt.s32.totalorder %s148, 1
          %s150 = scalar_select %p149, %s148, 1
          %s151 = scalar_lea.vmem %s2, %s150
          %s152 = smul.u32 2, %s22
        $region16: #{tpu_custom_call.1} parent=11 // pred_fallthru
          _
      $region12: #{tpu_custom_call.1} parent=5 // pred_fallthru
        _
      %p153 = scmp.lt.s32.totalorder %s12, 2
      // Predicated region
      $region17: #{tpu_custom_call.1} parent=5 // pred_check
        %p154 = pneg %p153
      $region18: #{tpu_custom_call.1} parent=5 // pred_check_branch
        %156 = sbr.rel (%p154) target = $region20
      $region19: #{tpu_custom_call.1} parent=5 // pred_region
        // Predicated region
        $region21: #{tpu_custom_call.1} parent=19 // pred_check
          %p157 = pneg %p46
        $region22: #{tpu_custom_call.1} parent=19 // pred_check_branch
          %159 = sbr.rel (%p157) target = $region24
        $region23: #{tpu_custom_call.1} parent=19 // pred_region
          %s160 = smul.u32 16, %s19
          %s161 = smul.u32 2, %s20
          %p162 = scmp.lt.s32.totalorder %s160, 31
          %s163 = scalar_select %p162, %s160, 31
          %p164 = scmp.lt.s32.totalorder %s161, 1
          %s165 = scalar_select %p164, %s161, 1
          %s166 = smul.addr %s163, 2
          %s167 = sadd.s32 %s165, %s166
          %s168 = smul.addr %s167, 4
          %s169 = scalar_lea.vmem %s0, %s168
          %s170 = smul.u32 16, %s19
          %s171 = smul.u32 2, %s20
        $region24: #{tpu_custom_call.1} parent=19 // pred_fallthru
          _
        // Predicated region
        $region25: #{tpu_custom_call.1} parent=19 // pred_check
          %p172 = pneg %p72
        $region26: #{tpu_custom_call.1} parent=19 // pred_check_branch
          %174 = sbr.rel (%p172) target = $region28
        $region27: #{tpu_custom_call.1} parent=19 // pred_region
          %s175 = smul.u32 16, %s19
          %p176 = scmp.lt.s32.totalorder %s175, 31
          %s177 = scalar_select %p176, %s175, 31
          %s178 = smul.addr %s177, 8
          %s179 = scalar_lea.vmem %s1, %s178
          %s180 = smul.u32 16, %s19
        $region28: #{tpu_custom_call.1} parent=19 // pred_fallthru
          _
      $region20: #{tpu_custom_call.1} parent=5 // pred_fallthru
        _
      %p181 = scmp.le.s32.totalorder 1, %s12
      %p182 = scmp.lt.s32.totalorder %s12, 3
      %p183 = pnand %p181, %p182
      %p184 = pneg %p183
      // Predicated region
      $region29: #{tpu_custom_call.1} parent=5 // pred_check
        _
      $region30: #{tpu_custom_call.1} parent=5 // pred_check_branch
        %186 = sbr.rel (%p183) target = $region32
      $region31: #{tpu_custom_call.1} parent=5 // pred_region
        %s187 = ssub.s32 %s12, 1
        %s188 = smul.u32 16, %s21
        %s189 = smul.u32 2, %s22
        %p190 = scmp.lt.s32.totalorder %s188, 31
        %s191 = scalar_select %p190, %s188, 31
        %p192 = scmp.lt.s32.totalorder %s189, 1
        %s193 = scalar_select %p192, %s189, 1
        %s194 = smul.addr %s191, 2
        %s195 = sadd.s32 %s193, %s194
        %s196 = smul.addr %s195, 4
        %s197 = scalar_lea.vmem %s0, %s196
        %p198 = pneg %p52
        %p199 = pneg %p49
        %s200 = smul.u32 16, %s21
        %p201 = scmp.lt.s32.totalorder %s200, 31
        %s202 = scalar_select %p201, %s200, 31
        %s203 = smul.addr %s202, 8
        %s204 = scalar_lea.vmem %s1, %s203
        %p205 = pneg %p78
        %p206 = pneg %p75
        %s207 = smul.u32 2, %s22
        %p208 = scmp.lt.s32.totalorder %s207, 1
        %s209 = scalar_select %p208, %s207, 1
        %s210 = scalar_lea.vmem %s2, %s209
        %p211 = pneg %p104
        %p212 = pneg %p101
        %p213 = pneg %p130
        %p214 = pneg %p127
        %s215 = sand.u32 %s117, 1
        %s216 = scalar_lea.sflag [#allocation4], %s215
        %s217 = sand.u32 %s117, 1
        %s218 = smul.addr %s217, 8
        %s219 = scalar_lea.vmem [#allocation3], %s218
        %s220 = smul.u32 16, %s21
        %s221 = smul.u32 2, %s22
        %p222 = scmp.lt.s32.totalorder %s220, 31
        %s223 = scalar_select %p222, %s220, 31
        %p224 = scmp.lt.s32.totalorder %s221, 1
        %s225 = scalar_select %p224, %s221, 1
        %s226 = smul.addr %s223, 2
        %s227 = sadd.s32 %s225, %s226
        %s228 = smul.addr %s227, 4
        %s229 = scalar_lea.vmem %s0, %s228
        %s230 = smul.u32 16, %s21
        %s231 = smul.u32 2, %s22
        %s232 = smul.u32 16, %s21
        %p233 = scmp.lt.s32.totalorder %s232, 31
        %s234 = scalar_select %p233, %s232, 31
        %s235 = smul.addr %s234, 8
        %s236 = scalar_lea.vmem %s1, %s235
        %s237 = smul.u32 16, %s21
        %s238 = smul.u32 2, %s22
        %p239 = scmp.lt.s32.totalorder %s238, 1
        %s240 = scalar_select %p239, %s238, 1
        %s241 = scalar_lea.vmem %s2, %s240
        %s242 = smul.u32 2, %s22
        %p243 = scmp.eq.s32.totalorder %s22, 0
        // Predicated region
        $region33: #{tpu_custom_call.1} parent=31 // pred_check
          %p244 = pneg %p243
        $region34: #{tpu_custom_call.1} parent=31 // pred_check_branch
          %246 = sbr.rel (%p244) target = $region36
        $region35: #{tpu_custom_call.1} parent=31 // pred_region
          %247 = vst [vmem:[#allocation2] sm:$0xff] 0.0
          %248 = vst [vmem:[#allocation2 + $0x8] sm:$0xff] 0.0
        $region36: #{tpu_custom_call.1} parent=31 // pred_fallthru
          _
        %v249 = vld [vmem:[%s229] sm:$0xff]
        %v250 = vld [vmem:[%s229 + $0x8] sm:$0xff]
        %v251 = vld [vmem:[%s229 + $0x10] sm:$0xff]
        %v252 = vld [vmem:[%s229 + $0x18] sm:$0xff]
        %v253 = vld [vmem:[%s229 + $0x20] sm:$0xff]
        %v254 = vld [vmem:[%s229 + $0x28] sm:$0xff]
        %v255 = vld [vmem:[%s229 + $0x30] sm:$0xff]
        %v256 = vld [vmem:[%s229 + $0x38] sm:$0xff]
        %v257 = vld [vmem:[%s229 + $0x40] sm:$0xff]
        %v258 = vld [vmem:[%s229 + $0x48] sm:$0xff]
        %v259 = vld [vmem:[%s229 + $0x50] sm:$0xff]
        %v260 = vld [vmem:[%s229 + $0x58] sm:$0xff]
        %v261 = vld [vmem:[%s229 + $0x60] sm:$0xff]
        %v262 = vld [vmem:[%s229 + $0x68] sm:$0xff]
        %v263 = vld [vmem:[%s229 + $0x70] sm:$0xff]
        %v264 = vld [vmem:[%s229 + $0x78] sm:$0xff]
        %v265 = vunpack.c.l.bf16 %v249
        %v266 = vunpack.c.h.bf16 %v249
        %v267 = vunpack.c.l.bf16 %v250
        %v268 = vunpack.c.h.bf16 %v250
        %v269 = vunpack.c.l.bf16 %v251
        %v270 = vunpack.c.h.bf16 %v251
        %v271 = vunpack.c.l.bf16 %v252
        %v272 = vunpack.c.h.bf16 %v252
        %v273 = vunpack.c.l.bf16 %v253
        %v274 = vunpack.c.h.bf16 %v253
        %v275 = vunpack.c.l.bf16 %v254
        %v276 = vunpack.c.h.bf16 %v254
        %v277 = vunpack.c.l.bf16 %v255
        %v278 = vunpack.c.h.bf16 %v255
        %v279 = vunpack.c.l.bf16 %v256
        %v280 = vunpack.c.h.bf16 %v256
        %v281 = vunpack.c.l.bf16 %v257
        %v282 = vunpack.c.h.bf16 %v257
        %v283 = vunpack.c.l.bf16 %v258
        %v284 = vunpack.c.h.bf16 %v258
        %v285 = vunpack.c.l.bf16 %v259
        %v286 = vunpack.c.h.bf16 %v259
        %v287 = vunpack.c.l.bf16 %v260
        %v288 = vunpack.c.h.bf16 %v260
        %v289 = vunpack.c.l.bf16 %v261
        %v290 = vunpack.c.h.bf16 %v261
        %v291 = vunpack.c.l.bf16 %v262
        %v292 = vunpack.c.h.bf16 %v262
        %v293 = vunpack.c.l.bf16 %v263
        %v294 = vunpack.c.h.bf16 %v263
        %v295 = vunpack.c.l.bf16 %v264
        %v296 = vunpack.c.h.bf16 %v264
        %v297 = vld [vmem:[%s241] sm:$0x3]
        %v298 = vld [vmem:[%s236] sm:$0xff]
        %v299 = vld [vmem:[%s236 + $0x8] sm:$0xff]
        %v300 = vld [vmem:[%s236 + $0x10] sm:$0xff]
        %v301 = vld [vmem:[%s236 + $0x18] sm:$0xff]
        %v302 = vld [vmem:[%s236 + $0x20] sm:$0xff]
        %v303 = vld [vmem:[%s236 + $0x28] sm:$0xff]
        %v304 = vld [vmem:[%s236 + $0x30] sm:$0xff]
        %v305 = vld [vmem:[%s236 + $0x38] sm:$0xff]
        %v306 = vld [vmem:[%s236 + $0x40] sm:$0xff]
        %v307 = vld [vmem:[%s236 + $0x48] sm:$0xff]
        %v308 = vld [vmem:[%s236 + $0x50] sm:$0xff]
        %v309 = vld [vmem:[%s236 + $0x58] sm:$0xff]
        %v310 = vld [vmem:[%s236 + $0x60] sm:$0xff]
        %v311 = vld [vmem:[%s236 + $0x68] sm:$0xff]
        %v312 = vld [vmem:[%s236 + $0x70] sm:$0xff]
        %v313 = vld [vmem:[%s236 + $0x78] sm:$0xff]
        %v315 = vlaneseq
        %v316 = vshrl.u32 %v315, 7
        %v317 = vsub.s32 0, %v316
        %v318 = vrot.slane %v297, %v317
        %v319 = vlaneseq
        %v320 = vshrl.u32 %v319, 7
        %v321 = vsub.s32 1, %v320
        %v322 = vrot.slane %v297, %v321
        %326 = vset.pattern.permute.xlu0 0
        %327 = vperm.xlu0 %326, %v298
        %v328 = vpop.permute.xlu0 %327
        %331 = vset.pattern.permute.xlu0 0
        %332 = vperm.xlu0 %331, %v299
        %v333 = vpop.permute.xlu0 %332
        %336 = vset.pattern.permute.xlu0 0
        %337 = vperm.xlu0 %336, %v300
        %v338 = vpop.permute.xlu0 %337
        %341 = vset.pattern.permute.xlu0 0
        %342 = vperm.xlu0 %341, %v301
        %v343 = vpop.permute.xlu0 %342
        %346 = vset.pattern.permute.xlu0 0
        %347 = vperm.xlu0 %346, %v302
        %v348 = vpop.permute.xlu0 %347
        %351 = vset.pattern.permute.xlu0 0
        %352 = vperm.xlu0 %351, %v303
        %v353 = vpop.permute.xlu0 %352
        %356 = vset.pattern.permute.xlu0 0
        %357 = vperm.xlu0 %356, %v304
        %v358 = vpop.permute.xlu0 %357
        %361 = vset.pattern.permute.xlu0 0
        %362 = vperm.xlu0 %361, %v305
        %v363 = vpop.permute.xlu0 %362
        %366 = vset.pattern.permute.xlu0 0
        %367 = vperm.xlu0 %366, %v306
        %v368 = vpop.permute.xlu0 %367
        %371 = vset.pattern.permute.xlu0 0
        %372 = vperm.xlu0 %371, %v307
        %v373 = vpop.permute.xlu0 %372
        %376 = vset.pattern.permute.xlu0 0
        %377 = vperm.xlu0 %376, %v308
        %v378 = vpop.permute.xlu0 %377
        %381 = vset.pattern.permute.xlu0 0
        %382 = vperm.xlu0 %381, %v309
        %v383 = vpop.permute.xlu0 %382
        %386 = vset.pattern.permute.xlu0 0
        %387 = vperm.xlu0 %386, %v310
        %v388 = vpop.permute.xlu0 %387
        %391 = vset.pattern.permute.xlu0 0
        %392 = vperm.xlu0 %391, %v311
        %v393 = vpop.permute.xlu0 %392
        %396 = vset.pattern.permute.xlu0 0
        %397 = vperm.xlu0 %396, %v312
        %v398 = vpop.permute.xlu0 %397
        %401 = vset.pattern.permute.xlu0 0
        %402 = vperm.xlu0 %401, %v313
        %v403 = vpop.permute.xlu0 %402
        %v405 = vsub.f32 %v318, %v328
        %v406 = vsub.f32 %v322, %v328
        %v407 = vsub.f32 %v318, %v333
        %v408 = vsub.f32 %v322, %v333
        %v409 = vsub.f32 %v318, %v338
        %v410 = vsub.f32 %v322, %v338
        %v411 = vsub.f32 %v318, %v343
        %v412 = vsub.f32 %v322, %v343
        %v413 = vsub.f32 %v318, %v348
        %v414 = vsub.f32 %v322, %v348
        %v415 = vsub.f32 %v318, %v353
        %v416 = vsub.f32 %v322, %v353
        %v417 = vsub.f32 %v318, %v358
        %v418 = vsub.f32 %v322, %v358
        %v419 = vsub.f32 %v318, %v363
        %v420 = vsub.f32 %v322, %v363
        %v421 = vsub.f32 %v318, %v368
        %v422 = vsub.f32 %v322, %v368
        %v423 = vsub.f32 %v318, %v373
        %v424 = vsub.f32 %v322, %v373
        %v425 = vsub.f32 %v318, %v378
        %v426 = vsub.f32 %v322, %v378
        %v427 = vsub.f32 %v318, %v383
        %v428 = vsub.f32 %v322, %v383
        %v429 = vsub.f32 %v318, %v388
        %v430 = vsub.f32 %v322, %v388
        %v431 = vsub.f32 %v318, %v393
        %v432 = vsub.f32 %v322, %v393
        %v433 = vsub.f32 %v318, %v398
        %v434 = vsub.f32 %v322, %v398
        %v435 = vsub.f32 %v318, %v403
        %v436 = vsub.f32 %v322, %v403
        %v437 = vmul.f32 %v265, %v405
        %v438 = vmul.f32 %v266, %v406
        %v439 = vmul.f32 %v267, %v407
        %v440 = vmul.f32 %v268, %v408
        %v441 = vmul.f32 %v269, %v409
        %v442 = vmul.f32 %v270, %v410
        %v443 = vmul.f32 %v271, %v411
        %v444 = vmul.f32 %v272, %v412
        %v445 = vmul.f32 %v273, %v413
        %v446 = vmul.f32 %v274, %v414
        %v447 = vmul.f32 %v275, %v415
        %v448 = vmul.f32 %v276, %v416
        %v449 = vmul.f32 %v277, %v417
        %v450 = vmul.f32 %v278, %v418
        %v451 = vmul.f32 %v279, %v419
        %v452 = vmul.f32 %v280, %v420
        %v453 = vmul.f32 %v281, %v421
        %v454 = vmul.f32 %v282, %v422
        %v455 = vmul.f32 %v283, %v423
        %v456 = vmul.f32 %v284, %v424
        %v457 = vmul.f32 %v285, %v425
        %v458 = vmul.f32 %v286, %v426
        %v459 = vmul.f32 %v287, %v427
        %v460 = vmul.f32 %v288, %v428
        %v461 = vmul.f32 %v289, %v429
        %v462 = vmul.f32 %v290, %v430
        %v463 = vmul.f32 %v291, %v431
        %v464 = vmul.f32 %v292, %v432
        %v465 = vmul.f32 %v293, %v433
        %v466 = vmul.f32 %v294, %v434
        %v467 = vmul.f32 %v295, %v435
        %v468 = vmul.f32 %v296, %v436
        %v469 = vmul.f32 %v437, %v405
        %v470 = vmul.f32 %v438, %v406
        %v471 = vmul.f32 %v439, %v407
        %v472 = vmul.f32 %v440, %v408
        %v473 = vmul.f32 %v441, %v409
        %v474 = vmul.f32 %v442, %v410
        %v475 = vmul.f32 %v443, %v411
        %v476 = vmul.f32 %v444, %v412
        %v477 = vmul.f32 %v445, %v413
        %v478 = vmul.f32 %v446, %v414
        %v479 = vmul.f32 %v447, %v415
        %v480 = vmul.f32 %v448, %v416
        %v481 = vmul.f32 %v449, %v417
        %v482 = vmul.f32 %v450, %v418
        %v483 = vmul.f32 %v451, %v419
        %v484 = vmul.f32 %v452, %v420
        %v485 = vmul.f32 %v453, %v421
        %v486 = vmul.f32 %v454, %v422
        %v487 = vmul.f32 %v455, %v423
        %v488 = vmul.f32 %v456, %v424
        %v489 = vmul.f32 %v457, %v425
        %v490 = vmul.f32 %v458, %v426
        %v491 = vmul.f32 %v459, %v427
        %v492 = vmul.f32 %v460, %v428
        %v493 = vmul.f32 %v461, %v429
        %v494 = vmul.f32 %v462, %v430
        %v495 = vmul.f32 %v463, %v431
        %v496 = vmul.f32 %v464, %v432
        %v497 = vmul.f32 %v465, %v433
        %v498 = vmul.f32 %v466, %v434
        %v499 = vmul.f32 %v467, %v435
        %v500 = vmul.f32 %v468, %v436
        %v501 = vld [vmem:[#allocation2] sm:$0xff]
        %v502 = vld [vmem:[#allocation2 + $0x8] sm:$0xff]
        %v503 = vadd.f32 %v469, %v471
        %v504 = vadd.f32 %v503, %v473
        %v505 = vadd.f32 %v504, %v475
        %v506 = vadd.f32 %v505, %v477
        %v507 = vadd.f32 %v506, %v479
        %v508 = vadd.f32 %v507, %v481
        %v509 = vadd.f32 %v508, %v483
        %v510 = vadd.f32 %v509, %v485
        %v511 = vadd.f32 %v510, %v487
        %v512 = vadd.f32 %v511, %v489
        %v513 = vadd.f32 %v512, %v491
        %v514 = vadd.f32 %v513, %v493
        %v515 = vadd.f32 %v514, %v495
        %v516 = vadd.f32 %v515, %v497
        %v517 = vadd.f32 %v516, %v499
        %v518 = vadd.f32 %v470, %v472
        %v519 = vadd.f32 %v518, %v474
        %v520 = vadd.f32 %v519, %v476
        %v521 = vadd.f32 %v520, %v478
        %v522 = vadd.f32 %v521, %v480
        %v523 = vadd.f32 %v522, %v482
        %v524 = vadd.f32 %v523, %v484
        %v525 = vadd.f32 %v524, %v486
        %v526 = vadd.f32 %v525, %v488
        %v527 = vadd.f32 %v526, %v490
        %v528 = vadd.f32 %v527, %v492
        %v529 = vadd.f32 %v528, %v494
        %v530 = vadd.f32 %v529, %v496
        %v531 = vadd.f32 %v530, %v498
        %v532 = vadd.f32 %v531, %v500
        %v533 = vadd.f32 %v501, %v517
        %v534 = vadd.f32 %v502, %v532
        %535 = vst [vmem:[#allocation2] sm:$0xff] %v533
        %536 = vst [vmem:[#allocation2 + $0x8] sm:$0xff] %v534
        // Predicated region
        $region37: #{tpu_custom_call.1} parent=31 // pred_check
          %p537 = pneg %p243
        $region38: #{tpu_custom_call.1} parent=31 // pred_check_branch
          %539 = sbr.rel (%p537) target = $region40
        $region39: #{tpu_custom_call.1} parent=31 // pred_region
          %v540 = vld [vmem:[#allocation2] sm:$0xff]
          %v541 = vld [vmem:[#allocation2 + $0x8] sm:$0xff]
          %v542 = vadd.f32 %v540, %v541
          %543 = vadd.xlane.f32.xlu0 %v542
          %v544 = vpop.xlane.xlu0 %543
          %v545 = vrot.slane %v544, 4
          %v546 = vadd.f32 %v544, %v545
          %v547 = vrot.slane %v546, 2
          %v548 = vadd.f32 %v546, %v547
          %v549 = vrot.slane %v548, 1
          %v550 = vadd.f32 %v548, %v549
          %s551 = vtos %v550
          %v552 = vstv %s551
          %553 = vst [vmem:[%s219] sm:$0xff] %v552
        $region40: #{tpu_custom_call.1} parent=31 // pred_fallthru
          _
        %s554 = sand.u32 %s117, 1
        %s555 = scalar_lea.sflag [#allocation4], %s554
        %s556 = sand.u32 %s117, 1
        %s557 = smul.addr %s556, 8
        %s558 = scalar_lea.vmem [#allocation3], %s557
        // Predicated region
        $region41: #{tpu_custom_call.1} parent=31 // pred_check
          %p559 = pneg %p127
        $region42: #{tpu_custom_call.1} parent=31 // pred_check_branch
          %561 = sbr.rel (%p559) target = $region44
        $region43: #{tpu_custom_call.1} parent=31 // pred_region
          %s563 = ssub.s32 128, 128
          %564 = vsyncadd %s555, %s563
          %s565 = smul.addr %s21, 128
          %s566 = scalar_lea.hbm %s3, %s565
          %s568 = sshll.u32 %s558, 4
          %s569 = int_to_ptr.vmem [resolvable:$true] %s568
          %571 = dma.vmem_to_hbm [thread:$0]  %s569, 128, %s566, %s555
        $region44: #{tpu_custom_call.1} parent=31 // pred_fallthru
          _
      $region32: #{tpu_custom_call.1} parent=5 // pred_fallthru
        _
      %p572 = scmp.le.s32.totalorder 2, %s12
      // Predicated region
      $region45: #{tpu_custom_call.1} parent=5 // pred_check
        %p573 = pneg %p572
      $region46: #{tpu_custom_call.1} parent=5 // pred_check_branch
        %575 = sbr.rel (%p573) target = $region48
      $region47: #{tpu_custom_call.1} parent=5 // pred_region
        %s576 = ssub.s32 %s12, 2
        // Predicated region
        $region49: #{tpu_custom_call.1} parent=47 // pred_check
          %p577 = pneg %p133
        $region50: #{tpu_custom_call.1} parent=47 // pred_check_branch
          %579 = sbr.rel (%p577) target = $region52
        $region51: #{tpu_custom_call.1} parent=47 // pred_region
          %s580 = sand.u32 %s118, 1
          %s581 = scalar_lea.sflag [#allocation4], %s580
          %s582 = sand.u32 %s118, 1
          %s583 = smul.addr %s582, 8
          %s584 = scalar_lea.vmem [#allocation3], %s583
          %585 = dma.done %s581, 128
        $region52: #{tpu_custom_call.1} parent=47 // pred_fallthru
          _
      $region48: #{tpu_custom_call.1} parent=5 // pred_fallthru
        _
    $region6: #{tpu_custom_call.1} parent=1 // loop_footer
      %s16 = sadd.s32 1, %s12
    $region7: #{tpu_custom_call.1} parent=1 // loop_footer_branch
      %11 = sbr.rel target = $region3
    $region8: #{tpu_custom_call.1} parent=1 // loop_exit
      _
    %586 = vsyncpa [#allocation4], 1
    %s587 = scalar_lea.sflag [#allocation4], 1
    %588 = vsyncpa %s587, 1

</llo_original>
